<compile_context>
chip_gen: v6e
topology: v6e:2x2x1
jax: 0.10.0
libtpu: 0.0.40
codegen_flags: <defaults>
</compile_context>

<pallas_src>
import jax
import jax.numpy as jnp
from jax import lax
from jax.experimental import pallas as pl
from jax.experimental.pallas import tpu as pltpu


def _round_up(n, m):
    return ((n + m - 1) // m) * m


def _pad_axis(a, axis, new_size):
    pads = [(0, 0)] * a.ndim
    pads[axis] = (0, new_size - a.shape[axis])
    return jnp.pad(a, pads)


def _tpu_config():
    """Return (vmem_budget_bytes, want_batch_split) for the local TPU generation."""
    kind = ""
    try:
        kind = jax.devices()[0].device_kind.lower()
    except Exception:
        pass
    big_vmem = any(t in kind for t in ("v4", "v5", "v6"))       # 128 MiB physical VMEM
    single_core = any(t in kind for t in ("v5 lite", "v5e", "v6 lite", "v6e"))
    budget = (80 if big_vmem else 44) * 1024 * 1024             # v7x: 64 MiB physical
    return budget, (not single_core)


def _single_buffer_kw():
    # Loop-invariant blocks (constant index_map) are never re-fetched; a second
    # pipeline buffer only wastes VMEM.
    if hasattr(pl, "Buffered"):
        return {"pipeline_mode": pl.Buffered(1)}
    return {}


def _sigmoid(x):
    # sigmoid(x) = 0.5*tanh(x/2) + 0.5 : one EUP push (tanh) instead of
    # exp + reciprocal; exact at x == 0 (preserves the padded-column argument).
    return 0.5 * jnp.tanh(0.5 * x) + 0.5


# ---------------------------------------------------------------------------
# Phase 1: input projection  pre_gates = X @ W_ih^T + (b_ih + b_hh)
# ---------------------------------------------------------------------------
def _input_proj_kernel(x_ref, w_ih_ref, b_ref, pg_ref):
    pg = jnp.dot(x_ref[...], w_ih_ref[...], preferred_element_type=jnp.float32)
    pg_ref[...] = (pg + b_ref[...]).astype(pg_ref.dtype)


# ---------------------------------------------------------------------------
# Phase 2: serial recurrence (one grid step = `chunk` timesteps)
# ---------------------------------------------------------------------------
def _make_recurrence_kernel(chunk, seq_len):
    needs_mask = (seq_len % chunk) != 0   # only the padded tail needs masking
    f32 = jnp.float32

    def kernel(pg_ref, w_hh_ref, h_out_ref, h_ref, c_ref):
        # NOTE (correctness): this relies on the grid being
        # (batch tiles, time chunks) with the chunk axis *innermost* and marked
        # "arbitrary". h/c scratch is (re)initialized at c_idx == 0 and carried
        # across chunks of a batch tile; do not reorder the grid or mark the
        # chunk axis "parallel".
        c_idx = pl.program_id(1)
        n_chunks = pl.num_programs(1)
        hp = w_hh_ref.shape[0]            # lane-aligned padded hidden size

        @pl.when(c_idx == 0)
        def _():
            h_ref[...] = jnp.zeros_like(h_ref)
            c_ref[...] = jnp.zeros_like(c_ref)

        w_hh = w_hh_ref[...]              # hoisted, loop-invariant

        def step(t_local, carry, masked):
            h, c = carry
            gates = pg_ref[t_local].astype(f32) + jnp.dot(
                h.astype(w_hh.dtype), w_hh, preferred_element_type=f32)
            # Hp is a multiple of 128 -> lane-aligned gate slices.
            i_g = _sigmoid(gates[:, 0 * hp:1 * hp])
            f_g = _sigmoid(gates[:, 1 * hp:2 * hp])
            g_g = jnp.tanh(gates[:, 2 * hp:3 * hp])
            o_g = _sigmoid(gates[:, 3 * hp:4 * hp])
            c_new = f_g * c + i_g * g_g
            h_new = o_g * jnp.tanh(c_new)
            if masked:                    # compiled only into the tail chunk
                valid = (c_idx * chunk + t_local) < seq_len
                h_new = jnp.where(valid, h_new, h)
                c_new = jnp.where(valid, c_new, c)
            return h_new, c_new

        def run_chunk(masked):
            h, c = lax.fori_loop(
                0, chunk, lambda t, hc: step(t, hc, masked),
                (h_ref[...], c_ref[...]), unroll=True)
            h_ref[...] = h
            c_ref[...] = c

        if needs_mask:
            @pl.when(c_idx < n_chunks - 1)
            def _():
                run_chunk(False)

            @pl.when(c_idx == n_chunks - 1)
            def _():
                run_chunk(True)
        else:
            run_chunk(False)

        # Output block index is constant along the chunk axis, so the block is
        # VMEM-resident; a single write on the final chunk suffices.
        @pl.when(c_idx == n_chunks - 1)
        def _():
            h_out_ref[...] = h_ref[...].astype(h_out_ref.dtype)

    return kernel


def lstm_forward(x, w_ih, w_hh, b_ih, b_hh, w_out, b_out, *,
                 chunk=16, mxu_dtype=None):
    """x: (B, T, D) batch_first.  Returns (B, output_dim) = Linear(h_T)."""
    B, T, D = x.shape
    H = w_hh.shape[1]
    f32 = jnp.float32
    mm_dtype = jnp.dtype(jnp.bfloat16 if mxu_dtype is None else mxu_dtype)
    pg_dtype = jnp.dtype(f32) if mm_dtype == jnp.dtype(f32) else jnp.dtype(jnp.bfloat16)
    mm_bytes = mm_dtype.itemsize
    pg_bytes = pg_dtype.itemsize

    budget, want_split = _tpu_config()

    # ---- padded sizes ------------------------------------------------------
    Hp = _round_up(H, 128)                     # lane-aligned gate blocks
    G = 4 * Hp
    B_pad = _round_up(B, 8)                    # f32 sublane tile
    if B_pad > 128:
        B_pad = _round_up(B_pad, 128)
        BT = 128                               # >=2 batch tiles automatically
    elif want_split and B_pad >= 16:
        B_pad = _round_up(B_pad, 16)           # 2 tiles -> both TensorCores busy
        BT = B_pad // 2
    else:
        BT = B_pad
    n_btiles = B_pad // BT

    # ---- chunk: clamp to T and to the phase-2 VMEM budget, trim tail waste --
    chunk = max(1, min(chunk, T))

    def p2_vmem(ch):
        return (2 * ch * BT * G * pg_bytes     # pre-gates block (2 buffers)
                + 2 * Hp * G * mm_bytes        # W_hh (conservatively 2 buffers)
                + 2 * BT * Hp * 4              # h / c scratch
                + 2 * BT * Hp * 4)             # h_out block

    while chunk > 1 and p2_vmem(chunk) > int(budget * 0.85):
        chunk -= 1

    best_c, best_score = chunk, None
    for c in range(chunk, max(1, chunk // 2), -1):
        score = -(-T // c) + ((-T) % c)        # grid steps + wasted tail steps
        if best_score is None or score < best_score:
            best_c, best_score = c, score
    chunk = best_c

    n_chunks = -(-T // chunk)
    T_pad = n_chunks * chunk
    R = T_pad * B_pad

    # ---- phase-1 tiling (decoupled from `chunk`) ----------------------------
    gt = Hp
    for cand_gt in (G, 2 * Hp, Hp):
        need = (2 * 1024 * (D * mm_bytes + cand_gt * pg_bytes)
                + 2 * D * cand_gt * mm_bytes + 4 * cand_gt)
        if need <= int(budget * 0.6):
            gt = cand_gt
            break
    n_gtiles = G // gt

    target_rows = 1024
    while target_rows > 8 and (2 * target_rows * (D * mm_bytes + gt * pg_bytes)
                               + 2 * D * gt * mm_bytes) > int(budget * 0.6):
        target_rows //= 2
    rows_per_blk = 8
    cand = min(R, max(8, target_rows))
    cand -= cand % 8
    while cand >= 8:
        if R % cand == 0:
            rows_per_blk = cand
            break
        cand -= 8
    n_rblocks = R // rows_per_blk

    # ---- repack weights: gate-major blocks padded to Hp (order i,f,g,o) -----
    w_ih_g = jnp.transpose(w_ih.reshape(4, H, D), (0, 2, 1))        # (4, D, H)
    w_ih_p = jnp.transpose(_pad_axis(w_ih_g, 2, Hp), (1, 0, 2)).reshape(D, G)
    w_hh_g = jnp.transpose(w_hh.reshape(4, H, H), (0, 2, 1))        # (4, Hin, Hout)
    w_hh_g = _pad_axis(_pad_axis(w_hh_g, 2, Hp), 1, Hp)             # (4, Hp, Hp)
    w_hh_p = jnp.transpose(w_hh_g, (1, 0, 2)).reshape(Hp, G)
    bias_p = _pad_axis((b_ih + b_hh).reshape(4, H), 1, Hp).reshape(1, G).astype(f32)
    w_ih_mm = w_ih_p.astype(mm_dtype)
    w_hh_mm = w_hh_p.astype(mm_dtype)

    # ---- pad inputs: (B, T, D) -> flattened (T_pad * B_pad, D) --------------
    x_p = jnp.transpose(x, (1, 0, 2))                  # (T, B, D)
    x_p = _pad_axis(_pad_axis(x_p, 0, T_pad), 1, B_pad)
    x2d = x_p.reshape(R, D).astype(mm_dtype)

    use_sb = hasattr(pl, "Buffered")

    # ---- phase 1: all timesteps' input projection, parallel grid ------------
    def _phase1(single_w):
        wkw = _single_buffer_kw() if single_w else {}
        return pl.pallas_call(
            _input_proj_kernel,
            out_shape=jax.ShapeDtypeStruct((R, G), pg_dtype),
            grid_spec=pltpu.PrefetchScalarGridSpec(
                num_scalar_prefetch=0,
                grid=(n_rblocks, n_gtiles),
                in_specs=[
                    pl.BlockSpec((rows_per_blk, D), lambda r, g: (r, 0)),     # X rows
                    pl.BlockSpec((D, gt), lambda r, g: (0, g), **wkw),        # W_ih^T
                    pl.BlockSpec((1, gt), lambda r, g: (0, g), **wkw),        # bias
                ],
                out_specs=pl.BlockSpec((rows_per_blk, gt), lambda r, g: (r, g)),
            ),
            compiler_params=pltpu.CompilerParams(
                dimension_semantics=("parallel", "parallel"),
                vmem_limit_bytes=budget),
        )(x2d, w_ih_mm, bias_p)

    if use_sb and n_gtiles == 1:
        try:
            pre_gates = _phase1(True)
        except Exception:
            pre_gates = _phase1(False)
    else:
        pre_gates = _phase1(False)
    pre_gates = pre_gates.reshape(T_pad, B_pad, G)

    # ---- phase 2: serial recurrence over time chunks ------------------------
    def _phase2(single_w):
        wkw = _single_buffer_kw() if single_w else {}
        return pl.pallas_call(
            _make_recurrence_kernel(chunk, T),
            out_shape=jax.ShapeDtypeStruct((B_pad, Hp), f32),
            grid_spec=pltpu.PrefetchScalarGridSpec(
                num_scalar_prefetch=0,
                grid=(n_btiles, n_chunks),
                in_specs=[
                    # Pre-gates for this (batch tile, time chunk).
                    pl.BlockSpec((chunk, BT, G), lambda bt, c: (c, bt, 0)),
                    # Loop-invariant W_hh: constant index map, single-buffered.
                    pl.BlockSpec((Hp, G), lambda bt, c: (0, 0), **wkw),
                ],
                out_specs=pl.BlockSpec((BT, Hp), lambda bt, c: (bt, 0)),
                scratch_shapes=[
                    pltpu.VMEM((BT, Hp), f32),   # h carry (persists across chunks)
                    pltpu.VMEM((BT, Hp), f32),   # c carry
                ],
            ),
            compiler_params=pltpu.CompilerParams(
                dimension_semantics=("parallel", "arbitrary"),
                vmem_limit_bytes=budget),
        )(pre_gates, w_hh_mm)

    if use_sb:
        try:
            h_T = _phase2(True)
        except Exception:
            h_T = _phase2(False)
    else:
        h_T = _phase2(False)

    # ---- final Linear on the last hidden state (kept out of the kernel) -----
    h_last = h_T[:B, :H]                       # strip batch / hidden padding
    y = h_last @ w_out.T.astype(f32) + b_out.astype(f32)
    return y.astype(x.dtype)


def lstm_reference(x, w_ih, w_hh, b_ih, b_hh, w_out, b_out):
    """Pure-JAX reference matching PyTorch nn.LSTM + Linear semantics."""
    B, T, D = x.shape
    H = w_hh.shape[1]

    def step(carry, x_t):
        h, c = carry
        gates = x_t @ w_ih.T + h @ w_hh.T + b_ih + b_hh
        i_g = jax.nn.sigmoid(gates[:, 0 * H:1 * H])
        f_g = jax.nn.sigmoid(gates[:, 1 * H:2 * H])
        g_g = jnp.tanh(gates[:, 2 * H:3 * H])
        o_g = jax.nn.sigmoid(gates[:, 3 * H:4 * H])
        c = f_g * c + i_g * g_g
        h = o_g * jnp.tanh(c)
        return (h, c), h

    h0 = jnp.zeros((B, H), jnp.float32)
    c0 = jnp.zeros((B, H), jnp.float32)
    (h_T, _), _ = lax.scan(step, (h0, c0), jnp.transpose(x, (1, 0, 2)))
    return h_T @ w_out.T + b_out


if __name__ == "__main__":
    def make_inputs(key, B, T, D, H, O):
        ks = jax.random.split(key, 7)
        scale = 1.0 / jnp.sqrt(H)
        x = jax.random.normal(ks[0], (B, T, D), jnp.float32)
        w_ih = jax.random.uniform(ks[1], (4 * H, D), jnp.float32, -scale, scale)
        w_hh = jax.random.uniform(ks[2], (4 * H, H), jnp.float32, -scale, scale)
        b_ih = jax.random.uniform(ks[3], (4 * H,), jnp.float32, -scale, scale)
        b_hh = jax.random.uniform(ks[4], (4 * H,), jnp.float32, -scale, scale)
        w_out = jax.random.uniform(ks[5], (O, H), jnp.float32, -scale, scale)
        b_out = jax.random.uniform(ks[6], (O,), jnp.float32, -scale, scale)
        return x, w_ih, w_hh, b_ih, b_hh, w_out, b_out

    key = jax.random.PRNGKey(0)
    k1, k2 = jax.random.split(key)

    # Config 1: module-default small shapes (B=2, T=8, D=16, H=32, O=4).
    args1 = make_inputs(k1, 2, 8, 16, 32, 4)
    y1_ref = lstm_reference(*args1)
    # f32 matmul path: tight tolerance against the PyTorch-semantics reference.
    y1 = jax.block_until_ready(lstm_forward(*args1, mxu_dtype=jnp.float32))
    assert y1.shape == (2, 4)
    assert jnp.allclose(y1, y1_ref, atol=1e-4, rtol=1e-4), "config1 f32 mismatch"
    # Default path (bf16 matmul operands, f32 accumulation): looser tolerance.
    y1b = jax.block_until_ready(lstm_forward(*args1))
    assert jnp.allclose(y1b, y1_ref, atol=5e-2, rtol=5e-2), "config1 bf16 mismatch"

    # Config 2: odd sizes exercising batch/hidden padding and a masked tail chunk.
    args2 = make_inputs(k2, 5, 13, 24, 48, 7)
    y2_ref = lstm_reference(*args2)
    y2 = jax.block_until_ready(lstm_forward(*args2, chunk=4, mxu_dtype=jnp.float32))
    assert y2.shape == (5, 7)
    assert jnp.allclose(y2, y2_ref, atol=1e-4, rtol=1e-4), "config2 f32 mismatch"
    y2b = jax.block_until_ready(lstm_forward(*args2, chunk=4))
    assert jnp.allclose(y2b, y2_ref, atol=5e-2, rtol=5e-2), "config2 bf16 mismatch"

    # TODO(synk): fully_connected=True branch (Linear over flattened seq*hidden)
    # and num_layers>1 / dropout are not exercised by the default module config.
    print("KERNEL_OK")
</pallas_src>

<mosaic_0001>
module attributes {stable_mosaic.version = 11 : i64} {
  func.func @_input_proj_kernel(%arg0: i32, %arg1: i32, %arg2: memref<64x16xf32, #tpu.memory_space<vmem>>, %arg3: memref<16x512xf32, #tpu.memory_space<vmem>>, %arg4: memref<1x512xf32, #tpu.memory_space<vmem>>, %arg5: memref<64x512xf32, #tpu.memory_space<vmem>>) attributes {dimension_semantics = [#tpu.dimension_semantics<parallel>, #tpu.dimension_semantics<parallel>], iteration_bounds = array<i64: 1, 1>, scalar_prefetch = 0 : i64, scratch_operands = 0 : i64, tpu.core_type = #tpu.core_type<tc>, window_params = [{transform_indices = @transform_0, window_bounds = array<i64: 64, 16>}, {pipeline_mode = #tpu.pipeline_mode<synchronous>, transform_indices = @transform_1, window_bounds = array<i64: 16, 512>}, {pipeline_mode = #tpu.pipeline_mode<synchronous>, transform_indices = @transform_2, window_bounds = array<i64: 1, 512>}, {transform_indices = @transform_3, window_bounds = array<i64: 64, 512>}]} {
    %c0 = arith.constant 0 : index
    %c0_0 = arith.constant 0 : index
    %0 = vector.load %arg2[%c0, %c0_0] : memref<64x16xf32, #tpu.memory_space<vmem>>, vector<64x16xf32>
    %c0_1 = arith.constant 0 : index
    %c0_2 = arith.constant 0 : index
    %1 = vector.load %arg3[%c0_1, %c0_2] : memref<16x512xf32, #tpu.memory_space<vmem>>, vector<16x512xf32>
    %cst = arith.constant dense<0.000000e+00> : vector<64x512xf32>
    %2 = tpu.matmul %0, %1, %cst {dimension_numbers = #tpu.dot_dimension_numbers<[1], [0], [0], [1], [0, 0, 1, 1], [], []>} : vector<64x16xf32>, vector<16x512xf32>, vector<64x512xf32> -> vector<64x512xf32>
    %c0_3 = arith.constant 0 : index
    %c0_4 = arith.constant 0 : index
    %3 = vector.load %arg4[%c0_3, %c0_4] : memref<1x512xf32, #tpu.memory_space<vmem>>, vector<1x512xf32>
    %4 = vector.broadcast %3 : vector<1x512xf32> to vector<64x512xf32>
    %5 = arith.addf %2, %4 : vector<64x512xf32>
    %c0_5 = arith.constant 0 : index
    %c0_6 = arith.constant 0 : index
    %6 = vector.load %arg5[%c0_5, %c0_6] : memref<64x512xf32, #tpu.memory_space<vmem>>, vector<64x512xf32>
    tpu.vector_store %arg5[%c0_5, %c0_6], %5 {strides = array<i32>} : memref<64x512xf32, #tpu.memory_space<vmem>>, vector<64x512xf32>,
    return
  }
  func.func @transform_0(%arg0: i32, %arg1: i32) -> (i32, i32) {
    %c0_i32 = arith.constant 0 : i32
    %c0_i32_0 = arith.constant 0 : i32
    return %arg0, %c0_i32 : i32, i32
  }
  func.func @transform_1(%arg0: i32, %arg1: i32) -> (i32, i32) {
    %c0_i32 = arith.constant 0 : i32
    %c0_i32_0 = arith.constant 0 : i32
    return %c0_i32, %arg1 : i32, i32
  }
  func.func @transform_2(%arg0: i32, %arg1: i32) -> (i32, i32) {
    %c0_i32 = arith.constant 0 : i32
    %c0_i32_0 = arith.constant 0 : i32
    return %c0_i32, %arg1 : i32, i32
  }
  func.func @transform_3(%arg0: i32, %arg1: i32) -> (i32, i32) {
    %c0_i32 = arith.constant 0 : i32
    return %arg0, %arg1 : i32, i32
  }
}

module attributes {stable_mosaic.version = 11 : i64} {
  func.func @_input_proj_kernel(%arg0: i32, %arg1: i32, %arg2: memref<64x16xf32, #tpu.memory_space<vmem>>, %arg3: memref<16x512xf32, #tpu.memory_space<vmem>>, %arg4: memref<1x512xf32, #tpu.memory_space<vmem>>, %arg5: memref<64x512xf32, #tpu.memory_space<vmem>>) attributes {dimension_semantics = [#tpu.dimension_semantics<parallel>, #tpu.dimension_semantics<parallel>], iteration_bounds = array<i64: 1, 1>, scalar_prefetch = 0 : i64, scratch_operands = 0 : i64, tpu.core_type = #tpu.core_type<tc>, window_params = [{transform_indices = @transform_0, window_bounds = array<i64: 64, 16>}, {transform_indices = @transform_1, window_bounds = array<i64: 16, 512>}, {transform_indices = @transform_2, window_bounds = array<i64: 1, 512>}, {transform_indices = @transform_3, window_bounds = array<i64: 64, 512>}]} {
    %c0 = arith.constant 0 : index
    %c0_0 = arith.constant 0 : index
    %0 = vector.load %arg2[%c0, %c0_0] : memref<64x16xf32, #tpu.memory_space<vmem>>, vector<64x16xf32>
    %c0_1 = arith.constant 0 : index
    %c0_2 = arith.constant 0 : index
    %1 = vector.load %arg3[%c0_1, %c0_2] : memref<16x512xf32, #tpu.memory_space<vmem>>, vector<16x512xf32>
    %cst = arith.constant dense<0.000000e+00> : vector<64x512xf32>
    %2 = tpu.matmul %0, %1, %cst {dimension_numbers = #tpu.dot_dimension_numbers<[1], [0], [0], [1], [0, 0, 1, 1], [], []>} : vector<64x16xf32>, vector<16x512xf32>, vector<64x512xf32> -> vector<64x512xf32>
    %c0_3 = arith.constant 0 : index
    %c0_4 = arith.constant 0 : index
    %3 = vector.load %arg4[%c0_3, %c0_4] : memref<1x512xf32, #tpu.memory_space<vmem>>, vector<1x512xf32>
    %4 = vector.broadcast %3 : vector<1x512xf32> to vector<64x512xf32>
    %5 = arith.addf %2, %4 : vector<64x512xf32>
    %c0_5 = arith.constant 0 : index
    %c0_6 = arith.constant 0 : index
    %6 = vector.load %arg5[%c0_5, %c0_6] : memref<64x512xf32, #tpu.memory_space<vmem>>, vector<64x512xf32>
    tpu.vector_store %arg5[%c0_5, %c0_6], %5 {strides = array<i32>} : memref<64x512xf32, #tpu.memory_space<vmem>>, vector<64x512xf32>,
    return
  }
  func.func @transform_0(%arg0: i32, %arg1: i32) -> (i32, i32) {
    %c0_i32 = arith.constant 0 : i32
    %c0_i32_0 = arith.constant 0 : i32
    return %arg0, %c0_i32 : i32, i32
  }
  func.func @transform_1(%arg0: i32, %arg1: i32) -> (i32, i32) {
    %c0_i32 = arith.constant 0 : i32
    %c0_i32_0 = arith.constant 0 : i32
    return %c0_i32, %arg1 : i32, i32
  }
  func.func @transform_2(%arg0: i32, %arg1: i32) -> (i32, i32) {
    %c0_i32 = arith.constant 0 : i32
    %c0_i32_0 = arith.constant 0 : i32
    return %c0_i32, %arg1 : i32, i32
  }
  func.func @transform_3(%arg0: i32, %arg1: i32) -> (i32, i32) {
    %c0_i32 = arith.constant 0 : i32
    return %arg0, %arg1 : i32, i32
  }
}

</mosaic_0001>

<llo_original>
// kernel: tpu_custom_call.1
$region0: #{tpu_custom_call.1}
  #allocation0 [shape = 'u32[]', space=smem, size = 0x4, offset = 0x4, fixed_abs, tag = 'smem constant byte address 0x4 - core index']
  #allocation1 [shape = 'u32[144,128]{1,0:T(1,128)}', space=vmem, size = 0x12000, scoped, tag = 'internal scratch']
  %s0 = inlined_call_operand.vmem [shape: f32[64,16], index: 0, kind: input, shape index: {}]
  %s1 = inlined_call_operand.vmem [shape: f32[16,512], index: 1, kind: input, shape index: {}]
  %s2 = inlined_call_operand.vmem [shape: f32[1,512], index: 2, kind: input, shape index: {}]
  %s3 = inlined_call_operand.hbm [shape: f32[64,512], index: 3, kind: output, shape index: {}]
  %s4 = sld [smem:[#allocation0]]
  $region22: #{tpu_custom_call.1} parent=0
    _
  %s6 = ssub.s32 1, %s4
  %s7 = scalar_select 0, %s6, %s4
  $region1: #{tpu_custom_call.1} parent=0
    #allocation2 [shape = 'u8[131072]{0}', space=vmem, size = 0x20000, scoped, tag = 'output window, operand 0, single buffered']
    #allocation3 [shape = 's32[1]{0}', space=sflag, size = 0x4, scoped, tag = 'scoped memory for tpu_custom_call.1']
    %8 = vsyncpa [#allocation3], 0
    // Predicated region
    $region2: #{tpu_custom_call.1} parent=1 // pred_check
      _
    $region3: #{tpu_custom_call.1} parent=1 // pred_check_branch
      %10 = sbr.rel (0) target = $region5
    $region4: #{tpu_custom_call.1} parent=1 // pred_region
      _
    $region5: #{tpu_custom_call.1} parent=1 // pred_fallthru
      _
    // Predicated region
    $region6: #{tpu_custom_call.1} parent=1 // pred_check
      _
    $region7: #{tpu_custom_call.1} parent=1 // pred_check_branch
      %12 = sbr.rel (0) target = $region9
    $region8: #{tpu_custom_call.1} parent=1 // pred_region
      _
    $region9: #{tpu_custom_call.1} parent=1 // pred_fallthru
      _
    // Predicated region
    $region10: #{tpu_custom_call.1} parent=1 // pred_check
      _
    $region11: #{tpu_custom_call.1} parent=1 // pred_check_branch
      %14 = sbr.rel (0) target = $region13
    $region12: #{tpu_custom_call.1} parent=1 // pred_region
      _
    $region13: #{tpu_custom_call.1} parent=1 // pred_fallthru
      _
    %v15 = vld [vmem:[%s0] sm:$0xff]
    %v16 = vld [vmem:[%s0 + $0x8] sm:$0xff]
    %v17 = vld [vmem:[%s0 + $0x10] sm:$0xff]
    %v18 = vld [vmem:[%s0 + $0x18] sm:$0xff]
    %v19 = vld [vmem:[%s0 + $0x20] sm:$0xff]
    %v20 = vld [vmem:[%s0 + $0x28] sm:$0xff]
    %v21 = vld [vmem:[%s0 + $0x30] sm:$0xff]
    %v22 = vld [vmem:[%s0 + $0x38] sm:$0xff]
    %v23 = vld [vmem:[%s1] sm:$0xff]
    %v24 = vld [vmem:[%s1 + $0x8] sm:$0xff]
    %v25 = vld [vmem:[%s1 + $0x10] sm:$0xff]
    %v26 = vld [vmem:[%s1 + $0x18] sm:$0xff]
    %v27 = vld [vmem:[%s1 + $0x20] sm:$0xff]
    %v28 = vld [vmem:[%s1 + $0x28] sm:$0xff]
    %v29 = vld [vmem:[%s1 + $0x30] sm:$0xff]
    %v30 = vld [vmem:[%s1 + $0x38] sm:$0xff]
    %v31 = vld [vmem:[%s2] sm:$0xf]
    %v33 = vlaneseq
    %v34 = vshrl.u32 %v33, 7
    %v35 = vsub.s32 0, %v34
    %v36 = vrot.slane %v31, %v35
    %v37 = vlaneseq
    %v38 = vshrl.u32 %v37, 7
    %v39 = vsub.s32 1, %v38
    %v40 = vrot.slane %v31, %v39
    %v41 = vlaneseq
    %v42 = vshrl.u32 %v41, 7
    %v43 = vsub.s32 2, %v42
    %v44 = vrot.slane %v31, %v43
    %v45 = vlaneseq
    %v46 = vshrl.u32 %v45, 7
    %v47 = vsub.s32 3, %v46
    %v48 = vrot.slane %v31, %v47
    %vm53 = vcmask 130048
    %v55 = vsel %vm53, %v15, 0
    %v58 = vsel %vm53, %v16, 0
    %v61 = vsel %vm53, %v17, 0
    %v64 = vsel %vm53, %v18, 0
    %v67 = vsel %vm53, %v19, 0
    %v70 = vsel %vm53, %v20, 0
    %v73 = vsel %vm53, %v21, 0
    %v76 = vsel %vm53, %v22, 0
    %78 = vmatprep.subr.mxu0 0.0
    %79 = vmatpush1.msra.mxu0 0.0
    %80 = vmatprep.subr.mxu0 0.0
    %81 = vmatpush1.msra.mxu0 0.0
    %82 = vmatprep.subr.mxu0 0.0
    %83 = vmatpush1.msra.mxu0 0.0
    %84 = vmatprep.subr.mxu0 0.0
    %85 = vmatpush1.msra.mxu0 0.0
    %86 = vmatprep.subr.mxu0 0.0
    %87 = vmatpush1.msra.mxu0 0.0
    %88 = vmatprep.subr.mxu0 0.0
    %89 = vmatpush1.msra.mxu0 0.0
    %90 = vmatprep.subr.mxu0 0.0
    %91 = vmatpush1.msra.mxu0 0.0
    %92 = vmatprep.subr.mxu0 0.0
    %93 = vmatpush1.msra.mxu0 0.0
    %94 = vmatprep.subr.mxu0 0.0
    %95 = vmatpush1.msra.mxu0 0.0
    %96 = vmatprep.subr.mxu0 0.0
    %97 = vmatpush1.msra.mxu0 0.0
    %98 = vmatprep.subr.mxu0 0.0
    %99 = vmatpush1.msra.mxu0 0.0
    %100 = vmatprep.subr.mxu0 0.0
    %101 = vmatpush1.msra.mxu0 0.0
    %102 = vmatprep.subr.mxu0 0.0
    %103 = vmatpush1.msra.mxu0 0.0
    %104 = vmatprep.subr.mxu0 0.0
    %105 = vmatpush1.msra.mxu0 0.0
    %106 = vmatprep.subr.mxu0 %v28
    %107 = vmatpush1.msra.mxu0 %v27
    %108 = vmatprep.subr.mxu0 %v24
    %109 = vmatpush1.msra.mxu0 %v23
    %110 = vmatprep.subr.mxu0 0.0
    %111 = vmatpush2.msra.mxu0 0.0
    %112 = vmatprep.subr.mxu0 0.0
    %113 = vmatpush2.msra.mxu0 0.0
    %114 = vmatprep.subr.mxu0 0.0
    %115 = vmatpush2.msra.mxu0 0.0
    %116 = vmatprep.subr.mxu0 0.0
    %117 = vmatpush2.msra.mxu0 0.0
    %118 = vmatprep.subr.mxu0 0.0
    %119 = vmatpush2.msra.mxu0 0.0
    %120 = vmatprep.subr.mxu0 0.0
    %121 = vmatpush2.msra.mxu0 0.0
    %122 = vmatprep.subr.mxu0 0.0
    %123 = vmatpush2.msra.mxu0 0.0
    %124 = vmatprep.subr.mxu0 0.0
    %125 = vmatpush2.msra.mxu0 0.0
    %126 = vmatprep.subr.mxu0 0.0
    %127 = vmatpush2.msra.mxu0 0.0
    %128 = vmatprep.subr.mxu0 0.0
    %129 = vmatpush2.msra.mxu0 0.0
    %130 = vmatprep.subr.mxu0 0.0
    %131 = vmatpush2.msra.mxu0 0.0
    %132 = vmatprep.subr.mxu0 0.0
    %133 = vmatpush2.msra.mxu0 0.0
    %134 = vmatprep.subr.mxu0 0.0
    %135 = vmatpush2.msra.mxu0 0.0
    %136 = vmatprep.subr.mxu0 0.0
    %137 = vmatpush2.msra.mxu0 0.0
    %138 = vmatprep.subr.mxu0 0.0
    %139 = vmatpush2.msra.mxu0 0.0
    %140 = vmatprep.subr.mxu0 0.0
    %141 = vmatpush2.msra.mxu0 0.0
    %142 = vmatprep.mubr.f32.mxu0 0.0
    %143 = vmatmul.mubr.f32.gmra.mxu0 %v55
    %v144 = vpop.f32.mrf.mxu0
    %v145 = vadd.f32 %v36, %v144
    %v146 = vpop.f32.mrf.mxu0
    %v147 = vadd.f32 %v40, %v146
    %148 = vmatprep.mubr.f32.mxu0 0.0
    %149 = vmatmul.mubr.f32.gmra.mxu0 %v58
    %v150 = vpop.f32.mrf.mxu0
    %v151 = vadd.f32 %v36, %v150
    %v152 = vpop.f32.mrf.mxu0
    %v153 = vadd.f32 %v40, %v152
    %154 = vmatprep.mubr.f32.mxu0 0.0
    %155 = vmatmul.mubr.f32.gmra.mxu0 %v61
    %v156 = vpop.f32.mrf.mxu0
    %v157 = vadd.f32 %v36, %v156
    %v158 = vpop.f32.mrf.mxu0
    %v159 = vadd.f32 %v40, %v158
    %160 = vmatprep.mubr.f32.mxu0 0.0
    %161 = vmatmul.mubr.f32.gmra.mxu0 %v64
    %v162 = vpop.f32.mrf.mxu0
    %v163 = vadd.f32 %v36, %v162
    %v164 = vpop.f32.mrf.mxu0
    %v165 = vadd.f32 %v40, %v164
    %166 = vmatprep.mubr.f32.mxu0 0.0
    %167 = vmatmul.mubr.f32.gmra.mxu0 %v67
    %v168 = vpop.f32.mrf.mxu0
    %v169 = vadd.f32 %v36, %v168
    %v170 = vpop.f32.mrf.mxu0
    %v171 = vadd.f32 %v40, %v170
    %172 = vmatprep.mubr.f32.mxu0 0.0
    %173 = vmatmul.mubr.f32.gmra.mxu0 %v70
    %v174 = vpop.f32.mrf.mxu0
    %v175 = vadd.f32 %v36, %v174
    %v176 = vpop.f32.mrf.mxu0
    %v177 = vadd.f32 %v40, %v176
    %178 = vmatprep.mubr.f32.mxu0 0.0
    %179 = vmatmul.mubr.f32.gmra.mxu0 %v73
    %v180 = vpop.f32.mrf.mxu0
    %v181 = vadd.f32 %v36, %v180
    %v182 = vpop.f32.mrf.mxu0
    %v183 = vadd.f32 %v40, %v182
    %184 = vmatprep.mubr.f32.mxu0 0.0
    %185 = vmatmul.mubr.f32.gmra.mxu0 %v76
    %v186 = vpop.f32.mrf.mxu0
    %v187 = vadd.f32 %v36, %v186
    %v188 = vpop.f32.mrf.mxu0
    %v189 = vadd.f32 %v40, %v188
    %190 = vdwg.mxu0
    %191 = vmatprep.subr.mxu0 0.0
    %192 = vmatpush1.msra.mxu0 0.0
    %193 = vmatprep.subr.mxu0 0.0
    %194 = vmatpush1.msra.mxu0 0.0
    %195 = vmatprep.subr.mxu0 0.0
    %196 = vmatpush1.msra.mxu0 0.0
    %197 = vmatprep.subr.mxu0 0.0
    %198 = vmatpush1.msra.mxu0 0.0
    %199 = vmatprep.subr.mxu0 0.0
    %200 = vmatpush1.msra.mxu0 0.0
    %201 = vmatprep.subr.mxu0 0.0
    %202 = vmatpush1.msra.mxu0 0.0
    %203 = vmatprep.subr.mxu0 0.0
    %204 = vmatpush1.msra.mxu0 0.0
    %205 = vmatprep.subr.mxu0 0.0
    %206 = vmatpush1.msra.mxu0 0.0
    %207 = vmatprep.subr.mxu0 0.0
    %208 = vmatpush1.msra.mxu0 0.0
    %209 = vmatprep.subr.mxu0 0.0
    %210 = vmatpush1.msra.mxu0 0.0
    %211 = vmatprep.subr.mxu0 0.0
    %212 = vmatpush1.msra.mxu0 0.0
    %213 = vmatprep.subr.mxu0 0.0
    %214 = vmatpush1.msra.mxu0 0.0
    %215 = vmatprep.subr.mxu0 0.0
    %216 = vmatpush1.msra.mxu0 0.0
    %217 = vmatprep.subr.mxu0 0.0
    %218 = vmatpush1.msra.mxu0 0.0
    %219 = vmatprep.subr.mxu0 %v30
    %220 = vmatpush1.msra.mxu0 %v29
    %221 = vmatprep.subr.mxu0 %v26
    %222 = vmatpush1.msra.mxu0 %v25
    %223 = vmatprep.subr.mxu0 0.0
    %224 = vmatpush2.msra.mxu0 0.0
    %225 = vmatprep.subr.mxu0 0.0
    %226 = vmatpush2.msra.mxu0 0.0
    %227 = vmatprep.subr.mxu0 0.0
    %228 = vmatpush2.msra.mxu0 0.0
    %229 = vmatprep.subr.mxu0 0.0
    %230 = vmatpush2.msra.mxu0 0.0
    %231 = vmatprep.subr.mxu0 0.0
    %232 = vmatpush2.msra.mxu0 0.0
    %233 = vmatprep.subr.mxu0 0.0
    %234 = vmatpush2.msra.mxu0 0.0
    %235 = vmatprep.subr.mxu0 0.0
    %236 = vmatpush2.msra.mxu0 0.0
    %237 = vmatprep.subr.mxu0 0.0
    %238 = vmatpush2.msra.mxu0 0.0
    %239 = vmatprep.subr.mxu0 0.0
    %240 = vmatpush2.msra.mxu0 0.0
    %241 = vmatprep.subr.mxu0 0.0
    %242 = vmatpush2.msra.mxu0 0.0
    %243 = vmatprep.subr.mxu0 0.0
    %244 = vmatpush2.msra.mxu0 0.0
    %245 = vmatprep.subr.mxu0 0.0
    %246 = vmatpush2.msra.mxu0 0.0
    %247 = vmatprep.subr.mxu0 0.0
    %248 = vmatpush2.msra.mxu0 0.0
    %249 = vmatprep.subr.mxu0 0.0
    %250 = vmatpush2.msra.mxu0 0.0
    %251 = vmatprep.subr.mxu0 0.0
    %252 = vmatpush2.msra.mxu0 0.0
    %253 = vmatprep.subr.mxu0 0.0
    %254 = vmatpush2.msra.mxu0 0.0
    %255 = vmatprep.mubr.f32.mxu0 0.0
    %256 = vmatmul.mubr.f32.gmra.mxu0 %v55
    %v257 = vpop.f32.mrf.mxu0
    %v258 = vadd.f32 %v44, %v257
    %v259 = vpop.f32.mrf.mxu0
    %v260 = vadd.f32 %v48, %v259
    %261 = vmatprep.mubr.f32.mxu0 0.0
    %262 = vmatmul.mubr.f32.gmra.mxu0 %v58
    %v263 = vpop.f32.mrf.mxu0
    %v264 = vadd.f32 %v44, %v263
    %v265 = vpop.f32.mrf.mxu0
    %v266 = vadd.f32 %v48, %v265
    %267 = vmatprep.mubr.f32.mxu0 0.0
    %268 = vmatmul.mubr.f32.gmra.mxu0 %v61
    %v269 = vpop.f32.mrf.mxu0
    %v270 = vadd.f32 %v44, %v269
    %v271 = vpop.f32.mrf.mxu0
    %v272 = vadd.f32 %v48, %v271
    %273 = vmatprep.mubr.f32.mxu0 0.0
    %274 = vmatmul.mubr.f32.gmra.mxu0 %v64
    %v275 = vpop.f32.mrf.mxu0
    %v276 = vadd.f32 %v44, %v275
    %v277 = vpop.f32.mrf.mxu0
    %v278 = vadd.f32 %v48, %v277
    %279 = vmatprep.mubr.f32.mxu0 0.0
    %280 = vmatmul.mubr.f32.gmra.mxu0 %v67
    %v281 = vpop.f32.mrf.mxu0
    %v282 = vadd.f32 %v44, %v281
    %v283 = vpop.f32.mrf.mxu0
    %v284 = vadd.f32 %v48, %v283
    %285 = vmatprep.mubr.f32.mxu0 0.0
    %286 = vmatmul.mubr.f32.gmra.mxu0 %v70
    %v287 = vpop.f32.mrf.mxu0
    %v288 = vadd.f32 %v44, %v287
    %v289 = vpop.f32.mrf.mxu0
    %v290 = vadd.f32 %v48, %v289
    %291 = vmatprep.mubr.f32.mxu0 0.0
    %292 = vmatmul.mubr.f32.gmra.mxu0 %v73
    %v293 = vpop.f32.mrf.mxu0
    %v294 = vadd.f32 %v44, %v293
    %v295 = vpop.f32.mrf.mxu0
    %v296 = vadd.f32 %v48, %v295
    %297 = vmatprep.mubr.f32.mxu0 0.0
    %298 = vmatmul.mubr.f32.gmra.mxu0 %v76
    %v299 = vpop.f32.mrf.mxu0
    %v300 = vadd.f32 %v44, %v299
    %v301 = vpop.f32.mrf.mxu0
    %v302 = vadd.f32 %v48, %v301
    %303 = vdwg.mxu0
    %304 = vst [vmem:[#allocation2] sm:$0xff] %v145
    %305 = vst [vmem:[#allocation2 + $0x8] sm:$0xff] %v147
    %306 = vst [vmem:[#allocation2 + $0x10] sm:$0xff] %v258
    %307 = vst [vmem:[#allocation2 + $0x18] sm:$0xff] %v260
    %308 = vst [vmem:[#allocation2 + $0x20] sm:$0xff] %v151
    %309 = vst [vmem:[#allocation2 + $0x28] sm:$0xff] %v153
    %310 = vst [vmem:[#allocation2 + $0x30] sm:$0xff] %v264
    %311 = vst [vmem:[#allocation2 + $0x38] sm:$0xff] %v266
    %312 = vst [vmem:[#allocation2 + $0x40] sm:$0xff] %v157
    %313 = vst [vmem:[#allocation2 + $0x48] sm:$0xff] %v159
    %314 = vst [vmem:[#allocation2 + $0x50] sm:$0xff] %v270
    %315 = vst [vmem:[#allocation2 + $0x58] sm:$0xff] %v272
    %316 = vst [vmem:[#allocation2 + $0x60] sm:$0xff] %v163
    %317 = vst [vmem:[#allocation2 + $0x68] sm:$0xff] %v165
    %318 = vst [vmem:[#allocation2 + $0x70] sm:$0xff] %v276
    %319 = vst [vmem:[#allocation2 + $0x78] sm:$0xff] %v278
    %320 = vst [vmem:[#allocation2 + $0x80] sm:$0xff] %v169
    %321 = vst [vmem:[#allocation2 + $0x88] sm:$0xff] %v171
    %322 = vst [vmem:[#allocation2 + $0x90] sm:$0xff] %v282
    %323 = vst [vmem:[#allocation2 + $0x98] sm:$0xff] %v284
    %324 = vst [vmem:[#allocation2 + $0xa0] sm:$0xff] %v175
    %325 = vst [vmem:[#allocation2 + $0xa8] sm:$0xff] %v177
    %326 = vst [vmem:[#allocation2 + $0xb0] sm:$0xff] %v288
    %327 = vst [vmem:[#allocation2 + $0xb8] sm:$0xff] %v290
    %328 = vst [vmem:[#allocation2 + $0xc0] sm:$0xff] %v181
    %329 = vst [vmem:[#allocation2 + $0xc8] sm:$0xff] %v183
    %330 = vst [vmem:[#allocation2 + $0xd0] sm:$0xff] %v294
    %331 = vst [vmem:[#allocation2 + $0xd8] sm:$0xff] %v296
    %332 = vst [vmem:[#allocation2 + $0xe0] sm:$0xff] %v187
    %333 = vst [vmem:[#allocation2 + $0xe8] sm:$0xff] %v189
    %334 = vst [vmem:[#allocation2 + $0xf0] sm:$0xff] %v300
    %335 = vst [vmem:[#allocation2 + $0xf8] sm:$0xff] %v302
    // Predicated region
    $region14: #{tpu_custom_call.1} parent=1 // pred_check
      _
    $region15: #{tpu_custom_call.1} parent=1 // pred_check_branch
      %337 = sbr.rel (0) target = $region17
    $region16: #{tpu_custom_call.1} parent=1 // pred_region
      %s339 = ssub.s32 4096, 4096
      %340 = vsyncadd [#allocation3], %s339
      %s341 = sshll.u32 [#allocation2], 4
      %s342 = int_to_ptr.vmem [resolvable:$true] %s341
      %347 = dma.vmem_to_hbm [thread:$0]  %s342, 4096, %s3, [#allocation3], 512, 512, 32
    $region17: #{tpu_custom_call.1} parent=1 // pred_fallthru
      _
    // Predicated region
    $region18: #{tpu_custom_call.1} parent=1 // pred_check
      _
    $region19: #{tpu_custom_call.1} parent=1 // pred_check_branch
      %349 = sbr.rel (0) target = $region21
    $region20: #{tpu_custom_call.1} parent=1 // pred_region
      %350 = dma.done [#allocation3], 4096
    $region21: #{tpu_custom_call.1} parent=1 // pred_fallthru
      _
    %351 = vsyncpa [#allocation3], 1

// kernel: tpu_custom_call.1
$region0: #{tpu_custom_call.1}
  #allocation0 [shape = 'u32[]', space=smem, size = 0x4, offset = 0x4, fixed_abs, tag = 'smem constant byte address 0x4 - core index']
  #allocation1 [shape = 'u32[144,128]{1,0:T(1,128)}', space=vmem, size = 0x12000, scoped, tag = 'internal scratch']
  %s0 = inlined_call_operand.vmem [shape: f32[64,16], index: 0, kind: input, shape index: {}]
  %s1 = inlined_call_operand.vmem [shape: f32[16,512], index: 1, kind: input, shape index: {}]
  %s2 = inlined_call_operand.vmem [shape: f32[1,512], index: 2, kind: input, shape index: {}]
  %s3 = inlined_call_operand.hbm [shape: f32[64,512], index: 3, kind: output, shape index: {}]
  %s4 = sld [smem:[#allocation0]]
  $region22: #{tpu_custom_call.1} parent=0
    _
  %s6 = ssub.s32 1, %s4
  %s7 = scalar_select 0, %s6, %s4
  $region1: #{tpu_custom_call.1} parent=0
    #allocation2 [shape = 'u8[131072]{0}', space=vmem, size = 0x20000, scoped, tag = 'output window, operand 0, single buffered']
    #allocation3 [shape = 's32[1]{0}', space=sflag, size = 0x4, scoped, tag = 'scoped memory for tpu_custom_call.1']
    %8 = vsyncpa [#allocation3], 0
    // Predicated region
    $region2: #{tpu_custom_call.1} parent=1 // pred_check
      _
    $region3: #{tpu_custom_call.1} parent=1 // pred_check_branch
      %10 = sbr.rel (0) target = $region5
    $region4: #{tpu_custom_call.1} parent=1 // pred_region
      _
    $region5: #{tpu_custom_call.1} parent=1 // pred_fallthru
      _
    // Predicated region
    $region6: #{tpu_custom_call.1} parent=1 // pred_check
      _
    $region7: #{tpu_custom_call.1} parent=1 // pred_check_branch
      %12 = sbr.rel (0) target = $region9
    $region8: #{tpu_custom_call.1} parent=1 // pred_region
      _
    $region9: #{tpu_custom_call.1} parent=1 // pred_fallthru
      _
    // Predicated region
    $region10: #{tpu_custom_call.1} parent=1 // pred_check
      _
    $region11: #{tpu_custom_call.1} parent=1 // pred_check_branch
      %14 = sbr.rel (0) target = $region13
    $region12: #{tpu_custom_call.1} parent=1 // pred_region
      _
    $region13: #{tpu_custom_call.1} parent=1 // pred_fallthru
      _
    %v15 = vld [vmem:[%s0] sm:$0xff]
    %v16 = vld [vmem:[%s0 + $0x8] sm:$0xff]
    %v17 = vld [vmem:[%s0 + $0x10] sm:$0xff]
    %v18 = vld [vmem:[%s0 + $0x18] sm:$0xff]
    %v19 = vld [vmem:[%s0 + $0x20] sm:$0xff]
    %v20 = vld [vmem:[%s0 + $0x28] sm:$0xff]
    %v21 = vld [vmem:[%s0 + $0x30] sm:$0xff]
    %v22 = vld [vmem:[%s0 + $0x38] sm:$0xff]
    %v23 = vld [vmem:[%s1] sm:$0xff]
    %v24 = vld [vmem:[%s1 + $0x8] sm:$0xff]
    %v25 = vld [vmem:[%s1 + $0x10] sm:$0xff]
    %v26 = vld [vmem:[%s1 + $0x18] sm:$0xff]
    %v27 = vld [vmem:[%s1 + $0x20] sm:$0xff]
    %v28 = vld [vmem:[%s1 + $0x28] sm:$0xff]
    %v29 = vld [vmem:[%s1 + $0x30] sm:$0xff]
    %v30 = vld [vmem:[%s1 + $0x38] sm:$0xff]
    %v31 = vld [vmem:[%s2] sm:$0xf]
    %v33 = vlaneseq
    %v34 = vshrl.u32 %v33, 7
    %v35 = vsub.s32 0, %v34
    %v36 = vrot.slane %v31, %v35
    %v37 = vlaneseq
    %v38 = vshrl.u32 %v37, 7
    %v39 = vsub.s32 1, %v38
    %v40 = vrot.slane %v31, %v39
    %v41 = vlaneseq
    %v42 = vshrl.u32 %v41, 7
    %v43 = vsub.s32 2, %v42
    %v44 = vrot.slane %v31, %v43
    %v45 = vlaneseq
    %v46 = vshrl.u32 %v45, 7
    %v47 = vsub.s32 3, %v46
    %v48 = vrot.slane %v31, %v47
    %vm53 = vcmask 130048
    %v55 = vsel %vm53, %v15, 0
    %v58 = vsel %vm53, %v16, 0
    %v61 = vsel %vm53, %v17, 0
    %v64 = vsel %vm53, %v18, 0
    %v67 = vsel %vm53, %v19, 0
    %v70 = vsel %vm53, %v20, 0
    %v73 = vsel %vm53, %v21, 0
    %v76 = vsel %vm53, %v22, 0
    %78 = vmatprep.subr.mxu0 0.0
    %79 = vmatpush1.msra.mxu0 0.0
    %80 = vmatprep.subr.mxu0 0.0
    %81 = vmatpush1.msra.mxu0 0.0
    %82 = vmatprep.subr.mxu0 0.0
    %83 = vmatpush1.msra.mxu0 0.0
    %84 = vmatprep.subr.mxu0 0.0
    %85 = vmatpush1.msra.mxu0 0.0
    %86 = vmatprep.subr.mxu0 0.0
    %87 = vmatpush1.msra.mxu0 0.0
    %88 = vmatprep.subr.mxu0 0.0
    %89 = vmatpush1.msra.mxu0 0.0
    %90 = vmatprep.subr.mxu0 0.0
    %91 = vmatpush1.msra.mxu0 0.0
    %92 = vmatprep.subr.mxu0 0.0
    %93 = vmatpush1.msra.mxu0 0.0
    %94 = vmatprep.subr.mxu0 0.0
    %95 = vmatpush1.msra.mxu0 0.0
    %96 = vmatprep.subr.mxu0 0.0
    %97 = vmatpush1.msra.mxu0 0.0
    %98 = vmatprep.subr.mxu0 0.0
    %99 = vmatpush1.msra.mxu0 0.0
    %100 = vmatprep.subr.mxu0 0.0
    %101 = vmatpush1.msra.mxu0 0.0
    %102 = vmatprep.subr.mxu0 0.0
    %103 = vmatpush1.msra.mxu0 0.0
    %104 = vmatprep.subr.mxu0 0.0
    %105 = vmatpush1.msra.mxu0 0.0
    %106 = vmatprep.subr.mxu0 %v28
    %107 = vmatpush1.msra.mxu0 %v27
    %108 = vmatprep.subr.mxu0 %v24
    %109 = vmatpush1.msra.mxu0 %v23
    %110 = vmatprep.subr.mxu0 0.0
    %111 = vmatpush2.msra.mxu0 0.0
    %112 = vmatprep.subr.mxu0 0.0
    %113 = vmatpush2.msra.mxu0 0.0
    %114 = vmatprep.subr.mxu0 0.0
    %115 = vmatpush2.msra.mxu0 0.0
    %116 = vmatprep.subr.mxu0 0.0
    %117 = vmatpush2.msra.mxu0 0.0
    %118 = vmatprep.subr.mxu0 0.0
    %119 = vmatpush2.msra.mxu0 0.0
    %120 = vmatprep.subr.mxu0 0.0
    %121 = vmatpush2.msra.mxu0 0.0
    %122 = vmatprep.subr.mxu0 0.0
    %123 = vmatpush2.msra.mxu0 0.0
    %124 = vmatprep.subr.mxu0 0.0
    %125 = vmatpush2.msra.mxu0 0.0
    %126 = vmatprep.subr.mxu0 0.0
    %127 = vmatpush2.msra.mxu0 0.0
    %128 = vmatprep.subr.mxu0 0.0
    %129 = vmatpush2.msra.mxu0 0.0
    %130 = vmatprep.subr.mxu0 0.0
    %131 = vmatpush2.msra.mxu0 0.0
    %132 = vmatprep.subr.mxu0 0.0
    %133 = vmatpush2.msra.mxu0 0.0
    %134 = vmatprep.subr.mxu0 0.0
    %135 = vmatpush2.msra.mxu0 0.0
    %136 = vmatprep.subr.mxu0 0.0
    %137 = vmatpush2.msra.mxu0 0.0
    %138 = vmatprep.subr.mxu0 0.0
    %139 = vmatpush2.msra.mxu0 0.0
    %140 = vmatprep.subr.mxu0 0.0
    %141 = vmatpush2.msra.mxu0 0.0
    %142 = vmatprep.mubr.f32.mxu0 0.0
    %143 = vmatmul.mubr.f32.gmra.mxu0 %v55
    %v144 = vpop.f32.mrf.mxu0
    %v145 = vadd.f32 %v36, %v144
    %v146 = vpop.f32.mrf.mxu0
    %v147 = vadd.f32 %v40, %v146
    %148 = vmatprep.mubr.f32.mxu0 0.0
    %149 = vmatmul.mubr.f32.gmra.mxu0 %v58
    %v150 = vpop.f32.mrf.mxu0
    %v151 = vadd.f32 %v36, %v150
    %v152 = vpop.f32.mrf.mxu0
    %v153 = vadd.f32 %v40, %v152
    %154 = vmatprep.mubr.f32.mxu0 0.0
    %155 = vmatmul.mubr.f32.gmra.mxu0 %v61
    %v156 = vpop.f32.mrf.mxu0
    %v157 = vadd.f32 %v36, %v156
    %v158 = vpop.f32.mrf.mxu0
    %v159 = vadd.f32 %v40, %v158
    %160 = vmatprep.mubr.f32.mxu0 0.0
    %161 = vmatmul.mubr.f32.gmra.mxu0 %v64
    %v162 = vpop.f32.mrf.mxu0
    %v163 = vadd.f32 %v36, %v162
    %v164 = vpop.f32.mrf.mxu0
    %v165 = vadd.f32 %v40, %v164
    %166 = vmatprep.mubr.f32.mxu0 0.0
    %167 = vmatmul.mubr.f32.gmra.mxu0 %v67
    %v168 = vpop.f32.mrf.mxu0
    %v169 = vadd.f32 %v36, %v168
    %v170 = vpop.f32.mrf.mxu0
    %v171 = vadd.f32 %v40, %v170
    %172 = vmatprep.mubr.f32.mxu0 0.0
    %173 = vmatmul.mubr.f32.gmra.mxu0 %v70
    %v174 = vpop.f32.mrf.mxu0
    %v175 = vadd.f32 %v36, %v174
    %v176 = vpop.f32.mrf.mxu0
    %v177 = vadd.f32 %v40, %v176
    %178 = vmatprep.mubr.f32.mxu0 0.0
    %179 = vmatmul.mubr.f32.gmra.mxu0 %v73
    %v180 = vpop.f32.mrf.mxu0
    %v181 = vadd.f32 %v36, %v180
    %v182 = vpop.f32.mrf.mxu0
    %v183 = vadd.f32 %v40, %v182
    %184 = vmatprep.mubr.f32.mxu0 0.0
    %185 = vmatmul.mubr.f32.gmra.mxu0 %v76
    %v186 = vpop.f32.mrf.mxu0
    %v187 = vadd.f32 %v36, %v186
    %v188 = vpop.f32.mrf.mxu0
    %v189 = vadd.f32 %v40, %v188
    %190 = vdwg.mxu0
    %191 = vmatprep.subr.mxu0 0.0
    %192 = vmatpush1.msra.mxu0 0.0
    %193 = vmatprep.subr.mxu0 0.0
    %194 = vmatpush1.msra.mxu0 0.0
    %195 = vmatprep.subr.mxu0 0.0
    %196 = vmatpush1.msra.mxu0 0.0
    %197 = vmatprep.subr.mxu0 0.0
    %198 = vmatpush1.msra.mxu0 0.0
    %199 = vmatprep.subr.mxu0 0.0
    %200 = vmatpush1.msra.mxu0 0.0
    %201 = vmatprep.subr.mxu0 0.0
    %202 = vmatpush1.msra.mxu0 0.0
    %203 = vmatprep.subr.mxu0 0.0
    %204 = vmatpush1.msra.mxu0 0.0
    %205 = vmatprep.subr.mxu0 0.0
    %206 = vmatpush1.msra.mxu0 0.0
    %207 = vmatprep.subr.mxu0 0.0
    %208 = vmatpush1.msra.mxu0 0.0
    %209 = vmatprep.subr.mxu0 0.0
    %210 = vmatpush1.msra.mxu0 0.0
    %211 = vmatprep.subr.mxu0 0.0
    %212 = vmatpush1.msra.mxu0 0.0
    %213 = vmatprep.subr.mxu0 0.0
    %214 = vmatpush1.msra.mxu0 0.0
    %215 = vmatprep.subr.mxu0 0.0
    %216 = vmatpush1.msra.mxu0 0.0
    %217 = vmatprep.subr.mxu0 0.0
    %218 = vmatpush1.msra.mxu0 0.0
    %219 = vmatprep.subr.mxu0 %v30
    %220 = vmatpush1.msra.mxu0 %v29
    %221 = vmatprep.subr.mxu0 %v26
    %222 = vmatpush1.msra.mxu0 %v25
    %223 = vmatprep.subr.mxu0 0.0
    %224 = vmatpush2.msra.mxu0 0.0
    %225 = vmatprep.subr.mxu0 0.0
    %226 = vmatpush2.msra.mxu0 0.0
    %227 = vmatprep.subr.mxu0 0.0
    %228 = vmatpush2.msra.mxu0 0.0
    %229 = vmatprep.subr.mxu0 0.0
    %230 = vmatpush2.msra.mxu0 0.0
    %231 = vmatprep.subr.mxu0 0.0
    %232 = vmatpush2.msra.mxu0 0.0
    %233 = vmatprep.subr.mxu0 0.0
    %234 = vmatpush2.msra.mxu0 0.0
    %235 = vmatprep.subr.mxu0 0.0
    %236 = vmatpush2.msra.mxu0 0.0
    %237 = vmatprep.subr.mxu0 0.0
    %238 = vmatpush2.msra.mxu0 0.0
    %239 = vmatprep.subr.mxu0 0.0
    %240 = vmatpush2.msra.mxu0 0.0
    %241 = vmatprep.subr.mxu0 0.0
    %242 = vmatpush2.msra.mxu0 0.0
    %243 = vmatprep.subr.mxu0 0.0
    %244 = vmatpush2.msra.mxu0 0.0
    %245 = vmatprep.subr.mxu0 0.0
    %246 = vmatpush2.msra.mxu0 0.0
    %247 = vmatprep.subr.mxu0 0.0
    %248 = vmatpush2.msra.mxu0 0.0
    %249 = vmatprep.subr.mxu0 0.0
    %250 = vmatpush2.msra.mxu0 0.0
    %251 = vmatprep.subr.mxu0 0.0
    %252 = vmatpush2.msra.mxu0 0.0
    %253 = vmatprep.subr.mxu0 0.0
    %254 = vmatpush2.msra.mxu0 0.0
    %255 = vmatprep.mubr.f32.mxu0 0.0
    %256 = vmatmul.mubr.f32.gmra.mxu0 %v55
    %v257 = vpop.f32.mrf.mxu0
    %v258 = vadd.f32 %v44, %v257
    %v259 = vpop.f32.mrf.mxu0
    %v260 = vadd.f32 %v48, %v259
    %261 = vmatprep.mubr.f32.mxu0 0.0
    %262 = vmatmul.mubr.f32.gmra.mxu0 %v58
    %v263 = vpop.f32.mrf.mxu0
    %v264 = vadd.f32 %v44, %v263
    %v265 = vpop.f32.mrf.mxu0
    %v266 = vadd.f32 %v48, %v265
    %267 = vmatprep.mubr.f32.mxu0 0.0
    %268 = vmatmul.mubr.f32.gmra.mxu0 %v61
    %v269 = vpop.f32.mrf.mxu0
    %v270 = vadd.f32 %v44, %v269
    %v271 = vpop.f32.mrf.mxu0
    %v272 = vadd.f32 %v48, %v271
    %273 = vmatprep.mubr.f32.mxu0 0.0
    %274 = vmatmul.mubr.f32.gmra.mxu0 %v64
    %v275 = vpop.f32.mrf.mxu0
    %v276 = vadd.f32 %v44, %v275
    %v277 = vpop.f32.mrf.mxu0
    %v278 = vadd.f32 %v48, %v277
    %279 = vmatprep.mubr.f32.mxu0 0.0
    %280 = vmatmul.mubr.f32.gmra.mxu0 %v67
    %v281 = vpop.f32.mrf.mxu0
    %v282 = vadd.f32 %v44, %v281
    %v283 = vpop.f32.mrf.mxu0
    %v284 = vadd.f32 %v48, %v283
    %285 = vmatprep.mubr.f32.mxu0 0.0
    %286 = vmatmul.mubr.f32.gmra.mxu0 %v70
    %v287 = vpop.f32.mrf.mxu0
    %v288 = vadd.f32 %v44, %v287
    %v289 = vpop.f32.mrf.mxu0
    %v290 = vadd.f32 %v48, %v289
    %291 = vmatprep.mubr.f32.mxu0 0.0
    %292 = vmatmul.mubr.f32.gmra.mxu0 %v73
    %v293 = vpop.f32.mrf.mxu0
    %v294 = vadd.f32 %v44, %v293
    %v295 = vpop.f32.mrf.mxu0
    %v296 = vadd.f32 %v48, %v295
    %297 = vmatprep.mubr.f32.mxu0 0.0
    %298 = vmatmul.mubr.f32.gmra.mxu0 %v76
    %v299 = vpop.f32.mrf.mxu0
    %v300 = vadd.f32 %v44, %v299
    %v301 = vpop.f32.mrf.mxu0
    %v302 = vadd.f32 %v48, %v301
    %303 = vdwg.mxu0
    %304 = vst [vmem:[#allocation2] sm:$0xff] %v145
    %305 = vst [vmem:[#allocation2 + $0x8] sm:$0xff] %v147
    %306 = vst [vmem:[#allocation2 + $0x10] sm:$0xff] %v258
    %307 = vst [vmem:[#allocation2 + $0x18] sm:$0xff] %v260
    %308 = vst [vmem:[#allocation2 + $0x20] sm:$0xff] %v151
    %309 = vst [vmem:[#allocation2 + $0x28] sm:$0xff] %v153
    %310 = vst [vmem:[#allocation2 + $0x30] sm:$0xff] %v264
    %311 = vst [vmem:[#allocation2 + $0x38] sm:$0xff] %v266
    %312 = vst [vmem:[#allocation2 + $0x40] sm:$0xff] %v157
    %313 = vst [vmem:[#allocation2 + $0x48] sm:$0xff] %v159
    %314 = vst [vmem:[#allocation2 + $0x50] sm:$0xff] %v270
    %315 = vst [vmem:[#allocation2 + $0x58] sm:$0xff] %v272
    %316 = vst [vmem:[#allocation2 + $0x60] sm:$0xff] %v163
    %317 = vst [vmem:[#allocation2 + $0x68] sm:$0xff] %v165
    %318 = vst [vmem:[#allocation2 + $0x70] sm:$0xff] %v276
    %319 = vst [vmem:[#allocation2 + $0x78] sm:$0xff] %v278
    %320 = vst [vmem:[#allocation2 + $0x80] sm:$0xff] %v169
    %321 = vst [vmem:[#allocation2 + $0x88] sm:$0xff] %v171
    %322 = vst [vmem:[#allocation2 + $0x90] sm:$0xff] %v282
    %323 = vst [vmem:[#allocation2 + $0x98] sm:$0xff] %v284
    %324 = vst [vmem:[#allocation2 + $0xa0] sm:$0xff] %v175
    %325 = vst [vmem:[#allocation2 + $0xa8] sm:$0xff] %v177
    %326 = vst [vmem:[#allocation2 + $0xb0] sm:$0xff] %v288
    %327 = vst [vmem:[#allocation2 + $0xb8] sm:$0xff] %v290
    %328 = vst [vmem:[#allocation2 + $0xc0] sm:$0xff] %v181
    %329 = vst [vmem:[#allocation2 + $0xc8] sm:$0xff] %v183
    %330 = vst [vmem:[#allocation2 + $0xd0] sm:$0xff] %v294
    %331 = vst [vmem:[#allocation2 + $0xd8] sm:$0xff] %v296
    %332 = vst [vmem:[#allocation2 + $0xe0] sm:$0xff] %v187
    %333 = vst [vmem:[#allocation2 + $0xe8] sm:$0xff] %v189
    %334 = vst [vmem:[#allocation2 + $0xf0] sm:$0xff] %v300
    %335 = vst [vmem:[#allocation2 + $0xf8] sm:$0xff] %v302
    // Predicated region
    $region14: #{tpu_custom_call.1} parent=1 // pred_check
      _
    $region15: #{tpu_custom_call.1} parent=1 // pred_check_branch
      %337 = sbr.rel (0) target = $region17
    $region16: #{tpu_custom_call.1} parent=1 // pred_region
      %s339 = ssub.s32 4096, 4096
      %340 = vsyncadd [#allocation3], %s339
      %s341 = sshll.u32 [#allocation2], 4
      %s342 = int_to_ptr.vmem [resolvable:$true] %s341
      %347 = dma.vmem_to_hbm [thread:$0]  %s342, 4096, %s3, [#allocation3], 512, 512, 32
    $region17: #{tpu_custom_call.1} parent=1 // pred_fallthru
      _
    // Predicated region
    $region18: #{tpu_custom_call.1} parent=1 // pred_check
      _
    $region19: #{tpu_custom_call.1} parent=1 // pred_check_branch
      %349 = sbr.rel (0) target = $region21
    $region20: #{tpu_custom_call.1} parent=1 // pred_region
      %350 = dma.done [#allocation3], 4096
    $region21: #{tpu_custom_call.1} parent=1 // pred_fallthru
      _
    %351 = vsyncpa [#allocation3], 1

</llo_original>
